<compile_context>
chip_gen: v7x
topology: tpu7x:2x2x1
jax: 0.10.0
libtpu: 0.0.40
codegen_flags: <defaults>
</compile_context>

<pallas_src>
import functools

import jax
import jax.numpy as jnp
from jax import lax
from jax.experimental import pallas as pl
from jax.experimental.pallas import tpu as pltpu


def _round_up(x, m):
    return ((x + m - 1) // m) * m


def _embedding_onehot_kernel(tok_ref, tbl_ref, out_ref):
    """out[t, :] = sum_c table_chunk[c][tok[t], :] via one-hot @ table on the MXU.

    tok_ref: VMEM (TN, 1)    int32     token / position indices for this tile
    tbl_ref: VMEM (C, V, E)  bfloat16  table split into C bf16 chunks (resident,
                                       single copy: non-windowed VMEM operand)
    out_ref: VMEM (TN, E)    float32   gathered embeddings for this tile
    """
    tn = out_ref.shape[0]
    v = tbl_ref.shape[1]

    tok = tok_ref[...]                                   # (TN, 1) int32
    col = lax.broadcasted_iota(jnp.int32, (tn, v), 1)    # (TN, V)
    # 0.0 / 1.0 are exact in bf16, so the one-hot operand never needs splitting:
    # each table chunk costs exactly one MXU pass.
    one_hot = (tok == col).astype(jnp.bfloat16)          # (TN, V)

    acc = jnp.dot(one_hot, tbl_ref[0], preferred_element_type=jnp.float32)
    for c in range(1, tbl_ref.shape[0]):                 # statically unrolled, C <= 3
        acc = acc + jnp.dot(one_hot, tbl_ref[c], preferred_element_type=jnp.float32)
    out_ref[...] = acc.astype(out_ref.dtype)


@functools.partial(jax.jit, static_argnames=("block_tokens", "exact"))
def positional_encoding_forward(tokens, emb_weight, *, block_tokens=None, exact=True):
    """Equivalent of PositionalEncoding(max_positions, emb_size)(tokens).

    exact=True : f32 table pre-split into 3 bf16 chunks -> bit-accurate gather,
                 3 single-pass bf16 MXU matmuls.
    exact=False: table cast to bf16 -> 1 MXU pass, rows are bf16-rounded.
    """
    B, S = tokens.shape
    V, E = emb_weight.shape
    N = B * S
    out_dtype = emb_weight.dtype

    # ---- lane-dense writeback: pad E up to a multiple of 128 only if needed ------
    e_pad = _round_up(E, 128)
    tbl = emb_weight
    if e_pad != E:
        tbl = jnp.pad(tbl, ((0, 0), (0, e_pad - E)))

    # ---- split the table into bf16 chunks (one MXU pass per chunk) ---------------
    n_chunks = 3 if (exact and tbl.dtype == jnp.float32) else 1
    chunks, resid = [], tbl.astype(jnp.float32)
    for _ in range(n_chunks):
        c = resid.astype(jnp.bfloat16)
        chunks.append(c)
        resid = resid - c.astype(jnp.float32)
    tbl_chunks = jnp.stack(chunks, axis=0)               # (C, V, e_pad) bf16

    # ---- token-tile size ----------------------------------------------------------
    tok_flat = tokens.reshape(N, 1).astype(jnp.int32)
    v_lane = _round_up(V, 128)
    if block_tokens is None:
        by_out = (1 << 20) // (e_pad * 4)                # ~1 MiB f32 output tile
        by_onehot = (2 << 20) // (v_lane * 2)            # ~2 MiB bf16 one-hot
        block_tokens = max(64, min(2048, by_out, by_onehot))
    block_tokens = max(8, (block_tokens // 8) * 8)

    if N <= block_tokens:
        # >=2 grid steps when possible so both v7x TensorCores get work.
        tn = _round_up((N + 1) // 2, 8) if N >= 16 else N
    else:
        tn = block_tokens
    grid = (pl.cdiv(N, tn),)  # partial last block: padded loads, masked stores

    # ---- explicit VMEM budget (table is single-buffered) --------------------------
    est_vmem = (
        n_chunks * V * e_pad * 2      # resident bf16 table chunks
        + 2 * tn * e_pad * 4          # double-buffered f32 output tile
        + 2 * tn * 128 * 4            # double-buffered token tile (lane-padded)
        + tn * v_lane * 2             # in-kernel bf16 one-hot
        + tn * e_pad * 4              # f32 accumulator
    )
    vmem_limit = int(min(64 << 20, max(16 << 20, 2 * est_vmem)))

    out = pl.pallas_call(
        _embedding_onehot_kernel,
        out_shape=jax.ShapeDtypeStruct((N, e_pad), out_dtype),
        grid=grid,
        in_specs=[
            pl.BlockSpec((tn, 1), lambda i: (i, 0)),            # token tile per step
            pl.BlockSpec(memory_space=pltpu.MemorySpace.VMEM),  # full table, one copy
        ],
        out_specs=pl.BlockSpec((tn, e_pad), lambda i: (i, 0)),
        compiler_params=pltpu.CompilerParams(
            dimension_semantics=("parallel",),                  # megacore on v7x
            vmem_limit_bytes=vmem_limit,
        ),
    )(tok_flat, tbl_chunks)

    if e_pad != E:
        out = out[:, :E]
    return out.reshape(B, S, E)


if __name__ == "__main__":
    # Module hyper-params (small, consistent with the forward pass)
    max_positions = 64   # vocabulary of positions
    emb_size = 128       # embedding dimension (lane-aligned)
    B, S = 2, 8          # batch, sequence

    key = jax.random.PRNGKey(0)
    k_w, k_t = jax.random.split(key)

    # nn.Embedding default init: weight ~ N(0, 1)
    emb_weight = jax.random.normal(k_w, (max_positions, emb_size), dtype=jnp.float32)
    tokens = jax.random.randint(k_t, (B, S), 0, max_positions, dtype=jnp.int32)

    out = positional_encoding_forward(tokens, emb_weight)
    out = jax.block_until_ready(out)

    # Reference: plain JAX gather (same semantics as torch nn.Embedding forward)
    ref = emb_weight[tokens]
    assert out.shape == (B, S, emb_size)
    assert out.dtype == jnp.float32
    assert jnp.allclose(out, ref, rtol=1e-6, atol=1e-6), (
        "Pallas embedding gather mismatch vs reference"
    )

    print("KERNEL_OK")
</pallas_src>

<mosaic_0001>
module attributes {stable_mosaic.version = 11 : i64} {
  func.func @_embedding_onehot_kernel(%arg0: i32, %arg1: memref<8x1xi32, #tpu.memory_space<vmem>>, %arg2: memref<3x64x128xbf16, #tpu.memory_space<vmem>>, %arg3: memref<8x128xf32, #tpu.memory_space<vmem>>) attributes {dimension_semantics = [#tpu.dimension_semantics<parallel>], iteration_bounds = array<i64: 2>, scalar_prefetch = 0 : i64, scratch_operands = 0 : i64, tpu.core_type = #tpu.core_type<tc>, window_params = [{transform_indices = @transform_0, window_bounds = array<i64: 8, 1>}, {pipeline_mode = #tpu.pipeline_mode<synchronous>, transform_indices = @transform_1, window_bounds = array<i64: 3, 64, 128>}, {transform_indices = @transform_2, window_bounds = array<i64: 8, 128>}]} {
    %c0 = arith.constant 0 : index
    %c0_0 = arith.constant 0 : index
    %0 = vector.load %arg1[%c0, %c0_0] : memref<8x1xi32, #tpu.memory_space<vmem>>, vector<8x1xi32>
    %1 = tpu.iota {dimensions = array<i32: 1>} : vector<8x64xi32>
    %2 = vector.broadcast %0 : vector<8x1xi32> to vector<8x64xi32>
    %3 = arith.cmpi eq, %2, %1 : vector<8x64xi32>
    %4 = arith.extui %3 : vector<8x64xi1> to vector<8x64xi32>
    %5 = arith.sitofp %4 : vector<8x64xi32> to vector<8x64xf32>
    %6 = arith.truncf %5 : vector<8x64xf32> to vector<8x64xbf16>
    %c0_1 = arith.constant 0 : index
    %c0_2 = arith.constant 0 : index
    %c0_3 = arith.constant 0 : index
    %7 = vector.load %arg2[%c0_1, %c0_2, %c0_3] : memref<3x64x128xbf16, #tpu.memory_space<vmem>>, vector<1x64x128xbf16>
    %8 = vector.shape_cast %7 : vector<1x64x128xbf16> to vector<64x128xbf16>
    %cst = arith.constant dense<0.000000e+00> : vector<8x128xf32>
    %9 = tpu.matmul %6, %8, %cst {dimension_numbers = #tpu.dot_dimension_numbers<[1], [0], [0], [1], [0, 0, 1, 1], [], []>} : vector<8x64xbf16>, vector<64x128xbf16>, vector<8x128xf32> -> vector<8x128xf32>
    %c1 = arith.constant 1 : index
    %c0_4 = arith.constant 0 : index
    %c0_5 = arith.constant 0 : index
    %10 = vector.load %arg2[%c1, %c0_4, %c0_5] : memref<3x64x128xbf16, #tpu.memory_space<vmem>>, vector<1x64x128xbf16>
    %11 = vector.shape_cast %10 : vector<1x64x128xbf16> to vector<64x128xbf16>
    %cst_6 = arith.constant dense<0.000000e+00> : vector<8x128xf32>
    %12 = tpu.matmul %6, %11, %cst_6 {dimension_numbers = #tpu.dot_dimension_numbers<[1], [0], [0], [1], [0, 0, 1, 1], [], []>} : vector<8x64xbf16>, vector<64x128xbf16>, vector<8x128xf32> -> vector<8x128xf32>
    %13 = arith.addf %9, %12 : vector<8x128xf32>
    %c2 = arith.constant 2 : index
    %c0_7 = arith.constant 0 : index
    %c0_8 = arith.constant 0 : index
    %14 = vector.load %arg2[%c2, %c0_7, %c0_8] : memref<3x64x128xbf16, #tpu.memory_space<vmem>>, vector<1x64x128xbf16>
    %15 = vector.shape_cast %14 : vector<1x64x128xbf16> to vector<64x128xbf16>
    %cst_9 = arith.constant dense<0.000000e+00> : vector<8x128xf32>
    %16 = tpu.matmul %6, %15, %cst_9 {dimension_numbers = #tpu.dot_dimension_numbers<[1], [0], [0], [1], [0, 0, 1, 1], [], []>} : vector<8x64xbf16>, vector<64x128xbf16>, vector<8x128xf32> -> vector<8x128xf32>
    %17 = arith.addf %13, %16 : vector<8x128xf32>
    %c0_10 = arith.constant 0 : index
    %c0_11 = arith.constant 0 : index
    %18 = vector.load %arg3[%c0_10, %c0_11] : memref<8x128xf32, #tpu.memory_space<vmem>>, vector<8x128xf32>
    tpu.vector_store %arg3[%c0_10, %c0_11], %17 {strides = array<i32>} : memref<8x128xf32, #tpu.memory_space<vmem>>, vector<8x128xf32>,
    return
  }
  func.func @transform_0(%arg0: i32) -> (i32, i32) {
    %c0_i32 = arith.constant 0 : i32
    %c0_i32_0 = arith.constant 0 : i32
    return %arg0, %c0_i32 : i32, i32
  }
  func.func @transform_1(%arg0: i32) -> (i32, i32, i32) {
    %c0_i32 = arith.constant 0 : i32
    %c0_i32_0 = arith.constant 0 : i32
    %c0_i32_1 = arith.constant 0 : i32
    %c0_i32_2 = arith.constant 0 : i32
    return %c0_i32, %c0_i32_0, %c0_i32_1 : i32, i32, i32
  }
  func.func @transform_2(%arg0: i32) -> (i32, i32) {
    %c0_i32 = arith.constant 0 : i32
    %c0_i32_0 = arith.constant 0 : i32
    return %arg0, %c0_i32 : i32, i32
  }
}

</mosaic_0001>

<llo_original>
// kernel: positional_encoding_forward.1
$region0: #{positional_encoding_forward.1}
  #allocation0 [shape = 'u32[]', space=smem, size = 0x4, offset = 0x4, fixed_abs, tag = 'smem constant byte address 0x4 - core index']
  #allocation1 [shape = 'u32[144,128]{1,0:T(1,128)}', space=vmem, size = 0x12000, scoped, tag = 'internal scratch']
  %s0 = inlined_call_operand.vmem [shape: s32[16,1], index: 0, kind: input, shape index: {}]
  %s1 = inlined_call_operand.vmem [shape: bf16[3,64,128], index: 1, kind: input, shape index: {}]
  %s2 = inlined_call_operand.hbm [shape: f32[16,128], index: 2, kind: output, shape index: {}]
  %s3 = sld [smem:[#allocation0]]
  $region41: #{positional_encoding_forward.1} parent=0
    _
  %s5 = ssub.s32 1, %s3
  %s6 = scalar_select 0, %s5, %s3
  $region1: #{positional_encoding_forward.1} parent=0
    #allocation2 [shape = 'u8[8192]{0}', space=vmem, size = 0x2000, scoped, tag = 'output window, operand 0']
    #allocation3 [shape = 's32[2]{0}', space=sflag, size = 0x8, scoped, tag = 'scoped memory for positional_encoding_forward.1']
    %7 = vsyncpa [#allocation3], 0
    %s8 = scalar_lea.sflag [#allocation3], 1
    %9 = vsyncpa %s8, 0
    loop: start=0, step=1, limit=4
    $region2: #{positional_encoding_forward.1} parent=1 // loop_pre_header
      _
    $region3: #{positional_encoding_forward.1} parent=1 // loop_header
      %s11 = sphi 0, %s15
      %p12 = scmp.ge.s32.totalorder %s11, 4
      %s21 = sphi 0, %s23
      %s24 = sphi 0, %s21
      %s25 = sphi 0, %s24
      %s41 = sphi 0, %s25
      %s45 = sphi 0, %s45
      %s47 = sphi 0, %s45
      %s48 = sphi 0, %s47
      %s62 = sphi 0, %s48
      %s68 = sphi 0, %s70
      %s71 = sphi 0, %s68
      %s72 = sphi 0, %s71
      %s88 = sphi 0, %s72
    $region4: #{positional_encoding_forward.1} parent=1 // loop_header_branch
      %14 = sbr.rel (%p12) target = $region8
    $region5: #{positional_encoding_forward.1} parent=1 // loop_body
      %s16 = ssub.s32 %s11, 1
      %s17 = ssub.s32 %s11, 2
      %s18 = sadd.s32 %s11, 1
      %s19 = ssub.s32 %s11, %s18
      %p20 = scmp.eq.s32.totalorder %s19, 0
      %s22 = sadd.s32 %s21, 1
      %s23 = scalar_select %p20, %s21, %s22
      %p26 = pneg %p20
      %p27 = scmp.eq.s32.totalorder %s11, 1
      %p28 = por %p26, %p27
      %p29 = scmp.ne.s32.totalorder %s21, %s24
      %p30 = scmp.eq.s32.totalorder %s11, 0
      %p31 = por %p29, %p30
      %p32 = scmp.ne.s32.totalorder %s21, %s24
      %p33 = scmp.eq.s32.totalorder %s16, 1
      %p34 = por %p32, %p33
      %p35 = scmp.ne.s32.totalorder %s24, %s25
      %p36 = scmp.eq.s32.totalorder %s16, 0
      %p37 = por %p35, %p36
      %p38 = scmp.ne.s32.totalorder %s24, %s25
      %p39 = scmp.eq.s32.totalorder %s17, 1
      %p40 = por %p38, %p39
      %p42 = scmp.ne.s32.totalorder %s25, %s41
      %p43 = scmp.eq.s32.totalorder %s17, 0
      %p44 = por %p42, %p43
      %s46 = sadd.s32 %s45, 1
      %p49 = scmp.eq.s32.totalorder %s11, 1
      %p50 = scmp.ne.s32.totalorder %s45, %s47
      %p51 = scmp.eq.s32.totalorder %s11, 0
      %p52 = por %p50, %p51
      %p53 = scmp.ne.s32.totalorder %s45, %s47
      %p54 = scmp.eq.s32.totalorder %s16, 1
      %p55 = por %p53, %p54
      %p56 = scmp.ne.s32.totalorder %s47, %s48
      %p57 = scmp.eq.s32.totalorder %s16, 0
      %p58 = por %p56, %p57
      %p59 = scmp.ne.s32.totalorder %s47, %s48
      %p60 = scmp.eq.s32.totalorder %s17, 1
      %p61 = por %p59, %p60
      %p63 = scmp.ne.s32.totalorder %s48, %s62
      %p64 = scmp.eq.s32.totalorder %s17, 0
      %p65 = por %p63, %p64
      %s66 = ssub.s32 %s11, %s18
      %p67 = scmp.eq.s32.totalorder %s66, 0
      %s69 = sadd.s32 %s68, 1
      %s70 = scalar_select %p67, %s68, %s69
      %p73 = pneg %p67
      %p74 = scmp.eq.s32.totalorder %s11, 1
      %p75 = por %p73, %p74
      %p76 = scmp.ne.s32.totalorder %s68, %s71
      %p77 = scmp.eq.s32.totalorder %s11, 0
      %p78 = por %p76, %p77
      %p79 = scmp.ne.s32.totalorder %s68, %s71
      %p80 = scmp.eq.s32.totalorder %s16, 1
      %p81 = por %p79, %p80
      %p82 = scmp.ne.s32.totalorder %s71, %s72
      %p83 = scmp.eq.s32.totalorder %s16, 0
      %p84 = por %p82, %p83
      %p85 = scmp.ne.s32.totalorder %s71, %s72
      %p86 = scmp.eq.s32.totalorder %s17, 1
      %p87 = por %p85, %p86
      %p89 = scmp.ne.s32.totalorder %s72, %s88
      %p90 = scmp.eq.s32.totalorder %s17, 0
      %p91 = por %p89, %p90
      %p92 = scmp.le.s32.totalorder 1, %s11
      %p93 = scmp.lt.s32.totalorder %s11, 3
      %p94 = pnand %p92, %p93
      %p95 = pneg %p94
      // Predicated region
      $region9: #{positional_encoding_forward.1} parent=5 // pred_check
        _
      $region10: #{positional_encoding_forward.1} parent=5 // pred_check_branch
        %97 = sbr.rel (%p94) target = $region12
      $region11: #{positional_encoding_forward.1} parent=5 // pred_region
        %s98 = ssub.s32 %s11, 1
        // Predicated region
        $region13: #{positional_encoding_forward.1} parent=11 // pred_check
          %p99 = pneg %p58
        $region14: #{positional_encoding_forward.1} parent=11 // pred_check_branch
          %101 = sbr.rel (%p99) target = $region16
        $region15: #{positional_encoding_forward.1} parent=11 // pred_region
          _
        $region16: #{positional_encoding_forward.1} parent=11 // pred_fallthru
          _
      $region12: #{positional_encoding_forward.1} parent=5 // pred_fallthru
        _
      %p102 = scmp.lt.s32.totalorder %s11, 2
      // Predicated region
      $region17: #{positional_encoding_forward.1} parent=5 // pred_check
        %p103 = pneg %p102
      $region18: #{positional_encoding_forward.1} parent=5 // pred_check_branch
        %105 = sbr.rel (%p103) target = $region20
      $region19: #{positional_encoding_forward.1} parent=5 // pred_region
        // Predicated region
        $region21: #{positional_encoding_forward.1} parent=19 // pred_check
          %p106 = pneg %p31
        $region22: #{positional_encoding_forward.1} parent=19 // pred_check_branch
          %108 = sbr.rel (%p106) target = $region24
        $region23: #{positional_encoding_forward.1} parent=19 // pred_region
          %p109 = scmp.lt.s32.totalorder %s11, 1
          %s110 = scalar_select %p109, %s11, 1
          %s111 = smul.addr %s110, 8
          %s112 = scalar_lea.vmem %s0, %s111
        $region24: #{positional_encoding_forward.1} parent=19 // pred_fallthru
          _
      $region20: #{positional_encoding_forward.1} parent=5 // pred_fallthru
        _
      %p113 = scmp.le.s32.totalorder 1, %s11
      %p114 = scmp.lt.s32.totalorder %s11, 3
      %p115 = pnand %p113, %p114
      %p116 = pneg %p115
      // Predicated region
      $region25: #{positional_encoding_forward.1} parent=5 // pred_check
        _
      $region26: #{positional_encoding_forward.1} parent=5 // pred_check_branch
        %118 = sbr.rel (%p115) target = $region28
      $region27: #{positional_encoding_forward.1} parent=5 // pred_region
        %s119 = ssub.s32 %s11, 1
        %p120 = scmp.lt.s32.totalorder %s16, 1
        %s121 = scalar_select %p120, %s16, 1
        %s122 = smul.addr %s121, 8
        %s123 = scalar_lea.vmem %s0, %s122
        %p124 = pneg %p37
        %p125 = pneg %p34
        %p126 = pneg %p58
        %p127 = pneg %p55
        %p128 = pneg %p84
        %p129 = pneg %p81
        %s130 = sand.u32 %s71, 1
        %s131 = scalar_lea.sflag [#allocation3], %s130
        %s132 = sand.u32 %s71, 1
        %s133 = smul.addr %s132, 8
        %s134 = scalar_lea.vmem [#allocation2], %s133
        %p135 = scmp.lt.s32.totalorder %s16, 1
        %s136 = scalar_select %p135, %s16, 1
        %s137 = smul.addr %s136, 8
        %s138 = scalar_lea.vmem %s0, %s137
        %v140 = vld [vmem:[%s138] sm:$0xff]
        %v141 = vlaneseq
        %v142 = vand.u32 %v141, 127
        %143 = vset.pattern.permute.xlu0 0
        %144 = vperm.xlu0 %143, %v140
        %v145 = vpop.permute.xlu0 %144
        %vm146 = vcmp.eq.s32.totalorder %v145, %v142
        %v147 = vsel %vm146, 1, 0
        %v148 = vcvt.s32.f32 %v147
        %v149 = vpack.c.bf16 %v148, %v148
        %v150 = vld [vmem:[%s1] sm:$0xf]
        %v151 = vld [vmem:[%s1 + $0x4] sm:$0xf]
        %v152 = vld [vmem:[%s1 + $0x8] sm:$0xf]
        %v153 = vld [vmem:[%s1 + $0xc] sm:$0xf]
        %v154 = vld [vmem:[%s1 + $0x10] sm:$0xf]
        %v155 = vld [vmem:[%s1 + $0x14] sm:$0xf]
        %v156 = vld [vmem:[%s1 + $0x18] sm:$0xf]
        %v157 = vld [vmem:[%s1 + $0x1c] sm:$0xf]
        %s158 = scalar_lea.vmem %s1, 32
        %v159 = vld [vmem:[%s158] sm:$0xf]
        %v160 = vld [vmem:[%s158 + $0x4] sm:$0xf]
        %v161 = vld [vmem:[%s158 + $0x8] sm:$0xf]
        %v162 = vld [vmem:[%s158 + $0xc] sm:$0xf]
        %v163 = vld [vmem:[%s158 + $0x10] sm:$0xf]
        %v164 = vld [vmem:[%s158 + $0x14] sm:$0xf]
        %v165 = vld [vmem:[%s158 + $0x18] sm:$0xf]
        %v166 = vld [vmem:[%s158 + $0x1c] sm:$0xf]
        %v175 = vunpack.c.l.b16 %v159
        %v176 = vunpack.c.l.b16 %v160
        %v177 = vunpack.c.l.b16 %v161
        %v178 = vunpack.c.l.b16 %v162
        %v179 = vunpack.c.l.b16 %v163
        %v180 = vunpack.c.l.b16 %v164
        %v181 = vunpack.c.l.b16 %v165
        %v182 = vunpack.c.l.b16 %v166
        %v183 = vpack.c.b16 %v176, %v175
        %v184 = vpack.c.b16 %v178, %v177
        %v185 = vpack.c.b16 %v180, %v179
        %v186 = vpack.c.b16 %v182, %v181
        %vm191 = vcmask 523264
        %v193 = vsel %vm191, %v149, 0
        %195 = vmatprep.subr.bf16.mxu0 0
        %196 = vmatpush1.bf16.msra.mxu0 %v183
        %197 = vmatprep.subr.bf16.mxu0 0
        %198 = vmatpush1.bf16.msra.mxu0 %v184
        %199 = vmatprep.subr.bf16.mxu0 0
        %200 = vmatpush1.bf16.msra.mxu0 %v185
        %201 = vmatprep.subr.bf16.mxu0 0
        %202 = vmatpush1.bf16.msra.mxu0 %v186
        %203 = vmatprep.subr.bf16.mxu0 0
        %204 = vmatpush1.bf16.msra.mxu0 0
        %205 = vmatprep.subr.bf16.mxu0 0
        %206 = vmatpush1.bf16.msra.mxu0 0
        %207 = vmatprep.subr.bf16.mxu0 0
        %208 = vmatpush1.bf16.msra.mxu0 0
        %209 = vmatprep.subr.bf16.mxu0 0
        %210 = vmatpush1.bf16.msra.mxu0 0
        %211 = vmatprep.subr.bf16.mxu0 0
        %212 = vmatpush1.bf16.msra.mxu0 0
        %213 = vmatprep.subr.bf16.mxu0 0
        %214 = vmatpush1.bf16.msra.mxu0 0
        %215 = vmatprep.subr.bf16.mxu0 0
        %216 = vmatpush1.bf16.msra.mxu0 0
        %217 = vmatprep.subr.bf16.mxu0 0
        %218 = vmatpush1.bf16.msra.mxu0 0
        %219 = vmatprep.subr.bf16.mxu0 0
        %220 = vmatpush1.bf16.msra.mxu0 0
        %221 = vmatprep.subr.bf16.mxu0 0
        %222 = vmatpush1.bf16.msra.mxu0 0
        %223 = vmatprep.subr.bf16.mxu0 0
        %224 = vmatpush1.bf16.msra.mxu0 0
        %225 = vmatprep.subr.bf16.mxu0 0
        %226 = vmatpush1.bf16.msra.mxu0 0
        %227 = vmatprep.mubr.bf16.mxu0 0
        %228 = vmatmul.mubr.bf16.gmra.mrb[0].mxu0 %v193
        %v229 = vpop.f32.mrb[0].mxu0
        %v230 = vadd.f32 0.0, %v229
        %v231 = vpop.f32.mrb[0].mxu0
        %v232 = vpop.f32.mrb[0].mxu0
        %v233 = vpop.f32.mrb[0].mxu0
        %234 = vdwg.mxu0
        %v243 = vunpack.c.l.b16 %v150
        %v244 = vunpack.c.l.b16 %v151
        %v245 = vunpack.c.l.b16 %v152
        %v246 = vunpack.c.l.b16 %v153
        %v247 = vunpack.c.l.b16 %v154
        %v248 = vunpack.c.l.b16 %v155
        %v249 = vunpack.c.l.b16 %v156
        %v250 = vunpack.c.l.b16 %v157
        %v251 = vpack.c.b16 %v244, %v243
        %v252 = vpack.c.b16 %v246, %v245
        %v253 = vpack.c.b16 %v248, %v247
        %v254 = vpack.c.b16 %v250, %v249
        %259 = vmatprep.subr.bf16.mxu0 0
        %260 = vmatpush1.bf16.msra.mxu0 %v251
        %261 = vmatprep.subr.bf16.mxu0 0
        %262 = vmatpush1.bf16.msra.mxu0 %v252
        %263 = vmatprep.subr.bf16.mxu0 0
        %264 = vmatpush1.bf16.msra.mxu0 %v253
        %265 = vmatprep.subr.bf16.mxu0 0
        %266 = vmatpush1.bf16.msra.mxu0 %v254
        %267 = vmatprep.subr.bf16.mxu0 0
        %268 = vmatpush1.bf16.msra.mxu0 0
        %269 = vmatprep.subr.bf16.mxu0 0
        %270 = vmatpush1.bf16.msra.mxu0 0
        %271 = vmatprep.subr.bf16.mxu0 0
        %272 = vmatpush1.bf16.msra.mxu0 0
        %273 = vmatprep.subr.bf16.mxu0 0
        %274 = vmatpush1.bf16.msra.mxu0 0
        %275 = vmatprep.subr.bf16.mxu0 0
        %276 = vmatpush1.bf16.msra.mxu0 0
        %277 = vmatprep.subr.bf16.mxu0 0
        %278 = vmatpush1.bf16.msra.mxu0 0
        %279 = vmatprep.subr.bf16.mxu0 0
        %280 = vmatpush1.bf16.msra.mxu0 0
        %281 = vmatprep.subr.bf16.mxu0 0
        %282 = vmatpush1.bf16.msra.mxu0 0
        %283 = vmatprep.subr.bf16.mxu0 0
        %284 = vmatpush1.bf16.msra.mxu0 0
        %285 = vmatprep.subr.bf16.mxu0 0
        %286 = vmatpush1.bf16.msra.mxu0 0
        %287 = vmatprep.subr.bf16.mxu0 0
        %288 = vmatpush1.bf16.msra.mxu0 0
        %289 = vmatprep.subr.bf16.mxu0 0
        %290 = vmatpush1.bf16.msra.mxu0 0
        %291 = vmatprep.mubr.bf16.mxu0 0
        %292 = vmatmul.mubr.bf16.gmra.mrb[0].mxu0 %v193
        %v293 = vpop.f32.mrb[0].mxu0
        %v294 = vadd.f32 %v230, %v293
        %v295 = vpop.f32.mrb[0].mxu0
        %v296 = vpop.f32.mrb[0].mxu0
        %v297 = vpop.f32.mrb[0].mxu0
        %298 = vdwg.mxu0
        %s299 = scalar_lea.vmem %s1, 64
        %v300 = vld [vmem:[%s299] sm:$0xf]
        %v301 = vld [vmem:[%s299 + $0x4] sm:$0xf]
        %v302 = vld [vmem:[%s299 + $0x8] sm:$0xf]
        %v303 = vld [vmem:[%s299 + $0xc] sm:$0xf]
        %v304 = vld [vmem:[%s299 + $0x10] sm:$0xf]
        %v305 = vld [vmem:[%s299 + $0x14] sm:$0xf]
        %v306 = vld [vmem:[%s299 + $0x18] sm:$0xf]
        %v307 = vld [vmem:[%s299 + $0x1c] sm:$0xf]
        %v316 = vunpack.c.l.b16 %v300
        %v317 = vunpack.c.l.b16 %v301
        %v318 = vunpack.c.l.b16 %v302
        %v319 = vunpack.c.l.b16 %v303
        %v320 = vunpack.c.l.b16 %v304
        %v321 = vunpack.c.l.b16 %v305
        %v322 = vunpack.c.l.b16 %v306
        %v323 = vunpack.c.l.b16 %v307
        %v324 = vpack.c.b16 %v317, %v316
        %v325 = vpack.c.b16 %v319, %v318
        %v326 = vpack.c.b16 %v321, %v320
        %v327 = vpack.c.b16 %v323, %v322
        %332 = vmatprep.subr.bf16.mxu0 0
        %333 = vmatpush1.bf16.msra.mxu0 %v324
        %334 = vmatprep.subr.bf16.mxu0 0
        %335 = vmatpush1.bf16.msra.mxu0 %v325
        %336 = vmatprep.subr.bf16.mxu0 0
        %337 = vmatpush1.bf16.msra.mxu0 %v326
        %338 = vmatprep.subr.bf16.mxu0 0
        %339 = vmatpush1.bf16.msra.mxu0 %v327
        %340 = vmatprep.subr.bf16.mxu0 0
        %341 = vmatpush1.bf16.msra.mxu0 0
        %342 = vmatprep.subr.bf16.mxu0 0
        %343 = vmatpush1.bf16.msra.mxu0 0
        %344 = vmatprep.subr.bf16.mxu0 0
        %345 = vmatpush1.bf16.msra.mxu0 0
        %346 = vmatprep.subr.bf16.mxu0 0
        %347 = vmatpush1.bf16.msra.mxu0 0
        %348 = vmatprep.subr.bf16.mxu0 0
        %349 = vmatpush1.bf16.msra.mxu0 0
        %350 = vmatprep.subr.bf16.mxu0 0
        %351 = vmatpush1.bf16.msra.mxu0 0
        %352 = vmatprep.subr.bf16.mxu0 0
        %353 = vmatpush1.bf16.msra.mxu0 0
        %354 = vmatprep.subr.bf16.mxu0 0
        %355 = vmatpush1.bf16.msra.mxu0 0
        %356 = vmatprep.subr.bf16.mxu0 0
        %357 = vmatpush1.bf16.msra.mxu0 0
        %358 = vmatprep.subr.bf16.mxu0 0
        %359 = vmatpush1.bf16.msra.mxu0 0
        %360 = vmatprep.subr.bf16.mxu0 0
        %361 = vmatpush1.bf16.msra.mxu0 0
        %362 = vmatprep.subr.bf16.mxu0 0
        %363 = vmatpush1.bf16.msra.mxu0 0
        %364 = vmatprep.mubr.bf16.mxu0 0
        %365 = vmatmul.mubr.bf16.gmra.mrb[0].mxu0 %v193
        %v366 = vpop.f32.mrb[0].mxu0
        %v367 = vadd.f32 0.0, %v366
        %v368 = vpop.f32.mrb[0].mxu0
        %v369 = vpop.f32.mrb[0].mxu0
        %v370 = vpop.f32.mrb[0].mxu0
        %371 = vdwg.mxu0
        %v372 = vadd.f32 %v294, %v367
        %373 = vst [vmem:[%s134] sm:$0xff] %v372
        %s374 = sand.u32 %s71, 1
        %s375 = scalar_lea.sflag [#allocation3], %s374
        %s376 = sand.u32 %s71, 1
        %s377 = smul.addr %s376, 8
        %s378 = scalar_lea.vmem [#allocation2], %s377
        // Predicated region
        $region29: #{positional_encoding_forward.1} parent=27 // pred_check
          %p379 = pneg %p81
        $region30: #{positional_encoding_forward.1} parent=27 // pred_check_branch
          %381 = sbr.rel (%p379) target = $region32
        $region31: #{positional_encoding_forward.1} parent=27 // pred_region
          %s383 = ssub.s32 128, 128
          %384 = vsyncadd %s375, %s383
          %s385 = smul.addr %s16, 128
          %s386 = scalar_lea.hbm %s2, %s385
          %s388 = sshll.u32 %s378, 4
          %s389 = int_to_ptr.vmem [resolvable:$true] %s388
          %391 = dma.vmem_to_hbm [thread:$0]  %s389, 128, %s386, %s375
        $region32: #{positional_encoding_forward.1} parent=27 // pred_fallthru
          _
      $region28: #{positional_encoding_forward.1} parent=5 // pred_fallthru
        _
      %p392 = scmp.le.s32.totalorder 2, %s11
      // Predicated region
      $region33: #{positional_encoding_forward.1} parent=5 // pred_check
        %p393 = pneg %p392
      $region34: #{positional_encoding_forward.1} parent=5 // pred_check_branch
        %395 = sbr.rel (%p393) target = $region36
      $region35: #{positional_encoding_forward.1} parent=5 // pred_region
        %s396 = ssub.s32 %s11, 2
        // Predicated region
        $region37: #{positional_encoding_forward.1} parent=35 // pred_check
          %p397 = pneg %p87
        $region38: #{positional_encoding_forward.1} parent=35 // pred_check_branch
          %399 = sbr.rel (%p397) target = $region40
        $region39: #{positional_encoding_forward.1} parent=35 // pred_region
          %s400 = sand.u32 %s72, 1
          %s401 = scalar_lea.sflag [#allocation3], %s400
          %s402 = sand.u32 %s72, 1
          %s403 = smul.addr %s402, 8
          %s404 = scalar_lea.vmem [#allocation2], %s403
          %405 = dma.done %s401, 128
        $region40: #{positional_encoding_forward.1} parent=35 // pred_fallthru
          _
      $region36: #{positional_encoding_forward.1} parent=5 // pred_fallthru
        _
    $region6: #{positional_encoding_forward.1} parent=1 // loop_footer
      %s15 = sadd.s32 1, %s11
    $region7: #{positional_encoding_forward.1} parent=1 // loop_footer_branch
      %10 = sbr.rel target = $region3
    $region8: #{positional_encoding_forward.1} parent=1 // loop_exit
      _
    %406 = vsyncpa [#allocation3], 1
    %s407 = scalar_lea.sflag [#allocation3], 1
    %408 = vsyncpa %s407, 1

</llo_original>
